<compile_context>
chip_gen: v6e
topology: v6e:2x2x1
jax: 0.10.0
libtpu: 0.0.40
codegen_flags: <defaults>
</compile_context>

<pallas_src>
import jax
import jax.numpy as jnp
import numpy as np
from jax.experimental import pallas as pl
from jax.experimental.pallas import tpu as pltpu

N = 2                       # demo batch
IN_FEATURES = 34 * 4        # 136
H1 = 256                    # fc1 out
H2 = 128                    # fc2 out
NUM_CLASSES = 2             # fc3 out
C_PAD = 128                 # output padded to a lane-dense width
B_PACK = H1 + H2 + C_PAD    # 512 packed bias lanes
NEG_PAD = -1e30             # finite "minus infinity" for padded logit lanes
MIN_M = 16                  # sublane granularity safe for f32 and bf16 tiles
BLOCK_M = 1024              # M tile for large batches (sweep 512-2048 per chip)


def net1_kernel(x_ref, w1_ref, w2_ref, w3_ref, b_ref, o_ref):
    b1 = b_ref[:, 0:H1]
    b2 = b_ref[:, H1:H1 + H2]
    b3 = b_ref[:, H1 + H2:B_PACK]
    # fc1 + ReLU  (bf16 MXU matmul, f32 accumulate / epilogue)
    x_bf = x_ref[...].astype(jnp.bfloat16)
    h = jnp.dot(x_bf, w1_ref[...], preferred_element_type=jnp.float32) + b1
    h = jnp.maximum(h, 0.0)
    # fc2 + ReLU
    h = jnp.dot(h.astype(jnp.bfloat16), w2_ref[...],
                preferred_element_type=jnp.float32) + b2
    h = jnp.maximum(h, 0.0)
    # fc3 (output columns >= NUM_CLASSES carry NEG_PAD bias -> ignored by softmax)
    logits = jnp.dot(h.astype(jnp.bfloat16), w3_ref[...],
                     preferred_element_type=jnp.float32) + b3
    # numerically stable log_softmax over the class dim (f32)
    m = jnp.max(logits, axis=-1, keepdims=True)
    z = logits - m
    lse = jnp.log(jnp.sum(jnp.exp(z), axis=-1, keepdims=True))
    o_ref[...] = (z - lse).astype(o_ref.dtype)


def prepare_params(params):
    """One-time layout prep: transpose, pad, bf16-cast weights, pack biases."""
    fc1_w, fc1_b, fc2_w, fc2_b, fc3_w, fc3_b = params
    w1 = jnp.asarray(fc1_w, jnp.float32).T.astype(jnp.bfloat16)      # (136, 256)
    w2 = jnp.asarray(fc2_w, jnp.float32).T.astype(jnp.bfloat16)      # (256, 128)
    w3 = (jnp.zeros((H2, C_PAD), jnp.float32)
          .at[:, :NUM_CLASSES].set(jnp.asarray(fc3_w, jnp.float32).T)
          .astype(jnp.bfloat16))                                     # (128, 128)
    b3p = (jnp.full((C_PAD,), NEG_PAD, jnp.float32)
           .at[:NUM_CLASSES].set(jnp.asarray(fc3_b, jnp.float32)))
    b_packed = jnp.concatenate([jnp.asarray(fc1_b, jnp.float32),
                                jnp.asarray(fc2_b, jnp.float32),
                                b3p])[None, :]                       # (1, 512) f32
    return jax.device_put((w1, w2, w3, b_packed))


def _round_up(a, b):
    return (a + b - 1) // b * b


def make_forward(prepared, *, block_m=BLOCK_M):
    """Returns a jitted forward fn closing over device-resident weights."""
    w1, w2, w3, b_packed = prepared

    def fwd(x):
        n = x.shape[0]
        xf = jnp.reshape(x, (n, -1)).astype(jnp.float32)             # flatten(1)
        if n <= block_m:
            m_pad = _round_up(n, MIN_M)
            bm, grid_m = m_pad, 1
        else:
            # Big tiles amortize per-grid-step overhead; keep >= 2 grid steps so
            # both v7x TensorCores are used (free on v5e/v6e: grid is a loop).
            bm = min(block_m, _round_up(_round_up(n, MIN_M) // 2, MIN_M))
            m_pad = _round_up(n, bm)
            grid_m = m_pad // bm
        # Pad batch rows only (no K padding); elided when m_pad == n.
        x_in = xf if m_pad == n else jnp.pad(xf, ((0, m_pad - n), (0, 0)))
        out = pl.pallas_call(
            net1_kernel,
            out_shape=jax.ShapeDtypeStruct((m_pad, C_PAD), jnp.bfloat16),
            grid=(grid_m,),
            in_specs=[
                pl.BlockSpec((bm, IN_FEATURES), lambda i: (i, 0)),   # x tile
                pl.BlockSpec((IN_FEATURES, H1), lambda i: (0, 0)),   # w1 (whole)
                pl.BlockSpec((H1, H2), lambda i: (0, 0)),            # w2 (whole)
                pl.BlockSpec((H2, C_PAD), lambda i: (0, 0)),         # w3 (whole)
                pl.BlockSpec((1, B_PACK), lambda i: (0, 0)),         # packed biases
            ],
            out_specs=pl.BlockSpec((bm, C_PAD), lambda i: (i, 0)),
            compiler_params=pltpu.CompilerParams(
                dimension_semantics=("parallel",)),
        )(x_in, w1, w2, w3, b_packed)
        return out[:n, :NUM_CLASSES].astype(jnp.float32)

    return jax.jit(fwd)


def init_params(key):
    """PyTorch-style (uniform +/- 1/sqrt(fan_in)) init for the three Linears."""
    ks = jax.random.split(key, 6)
    s1, s2, s3 = 1.0 / np.sqrt(IN_FEATURES), 1.0 / np.sqrt(H1), 1.0 / np.sqrt(H2)
    fc1_w = jax.random.uniform(ks[0], (H1, IN_FEATURES), jnp.float32, -s1, s1)
    fc1_b = jax.random.uniform(ks[1], (H1,), jnp.float32, -s1, s1)
    fc2_w = jax.random.uniform(ks[2], (H2, H1), jnp.float32, -s2, s2)
    fc2_b = jax.random.uniform(ks[3], (H2,), jnp.float32, -s2, s2)
    fc3_w = jax.random.uniform(ks[4], (NUM_CLASSES, H2), jnp.float32, -s3, s3)
    fc3_b = jax.random.uniform(ks[5], (NUM_CLASSES,), jnp.float32, -s3, s3)
    return fc1_w, fc1_b, fc2_w, fc2_b, fc3_w, fc3_b


if __name__ == "__main__":
    key = jax.random.PRNGKey(0)
    pkey, xkey = jax.random.split(key)
    params = init_params(pkey)

    prepared = prepare_params(params)      # one-time host prep, device resident
    net1_forward = make_forward(prepared)  # jitted wrapper

    x = jax.random.normal(xkey, (N, 34, 4), jnp.float32)
    out = jax.block_until_ready(net1_forward(x))

    # Pure-JAX f32 reference to verify semantics (kernel uses bf16 matmul inputs
    # with f32 accumulation and a bf16 output store -> loosened tolerance).
    fc1_w, fc1_b, fc2_w, fc2_b, fc3_w, fc3_b = params
    xf = x.reshape(N, -1)
    h = jnp.maximum(xf @ fc1_w.T + fc1_b, 0.0)
    h = jnp.maximum(h @ fc2_w.T + fc2_b, 0.0)
    logits = h @ fc3_w.T + fc3_b
    ref = jax.nn.log_softmax(logits, axis=1)

    np.testing.assert_allclose(np.asarray(out), np.asarray(ref),
                               rtol=2e-2, atol=2e-2)
    print("KERNEL_OK")
</pallas_src>

<mosaic_0001>
module attributes {stable_mosaic.version = 11 : i64} {
  func.func @net1_kernel(%arg0: i32, %arg1: memref<16x136xf32, #tpu.memory_space<vmem>>, %arg2: memref<136x256xbf16, #tpu.memory_space<vmem>>, %arg3: memref<256x128xbf16, #tpu.memory_space<vmem>>, %arg4: memref<128x128xbf16, #tpu.memory_space<vmem>>, %arg5: memref<1x512xf32, #tpu.memory_space<vmem>>, %arg6: memref<16x128xbf16, #tpu.memory_space<vmem>>) attributes {dimension_semantics = [#tpu.dimension_semantics<parallel>], iteration_bounds = array<i64: 1>, scalar_prefetch = 0 : i64, scratch_operands = 0 : i64, tpu.core_type = #tpu.core_type<tc>, window_params = [{transform_indices = @transform_0, window_bounds = array<i64: 16, 136>}, {pipeline_mode = #tpu.pipeline_mode<synchronous>, transform_indices = @transform_1, window_bounds = array<i64: 136, 256>}, {pipeline_mode = #tpu.pipeline_mode<synchronous>, transform_indices = @transform_2, window_bounds = array<i64: 256, 128>}, {pipeline_mode = #tpu.pipeline_mode<synchronous>, transform_indices = @transform_3, window_bounds = array<i64: 128, 128>}, {pipeline_mode = #tpu.pipeline_mode<synchronous>, transform_indices = @transform_4, window_bounds = array<i64: 1, 512>}, {transform_indices = @transform_5, window_bounds = array<i64: 16, 128>}]} {
    %c0 = arith.constant 0 : index
    %c0_0 = arith.constant 0 : index
    %0 = vector.load %arg5[%c0, %c0_0] : memref<1x512xf32, #tpu.memory_space<vmem>>, vector<1x256xf32>
    %c0_1 = arith.constant 0 : index
    %c256 = arith.constant 256 : index
    %1 = vector.load %arg5[%c0_1, %c256] : memref<1x512xf32, #tpu.memory_space<vmem>>, vector<1x128xf32>
    %c0_2 = arith.constant 0 : index
    %c384 = arith.constant 384 : index
    %2 = vector.load %arg5[%c0_2, %c384] : memref<1x512xf32, #tpu.memory_space<vmem>>, vector<1x128xf32>
    %c0_3 = arith.constant 0 : index
    %c0_4 = arith.constant 0 : index
    %3 = vector.load %arg1[%c0_3, %c0_4] : memref<16x136xf32, #tpu.memory_space<vmem>>, vector<16x136xf32>
    %4 = arith.truncf %3 : vector<16x136xf32> to vector<16x136xbf16>
    %c0_5 = arith.constant 0 : index
    %c0_6 = arith.constant 0 : index
    %5 = vector.load %arg2[%c0_5, %c0_6] : memref<136x256xbf16, #tpu.memory_space<vmem>>, vector<136x256xbf16>
    %cst = arith.constant dense<0.000000e+00> : vector<16x256xf32>
    %6 = tpu.matmul %4, %5, %cst {dimension_numbers = #tpu.dot_dimension_numbers<[1], [0], [0], [1], [0, 0, 1, 1], [], []>} : vector<16x136xbf16>, vector<136x256xbf16>, vector<16x256xf32> -> vector<16x256xf32>
    %7 = vector.broadcast %0 : vector<1x256xf32> to vector<16x256xf32>
    %8 = arith.addf %6, %7 : vector<16x256xf32>
    %cst_7 = arith.constant 0.000000e+00 : f32
    %9 = vector.broadcast %cst_7 : f32 to vector<16x256xf32>
    %10 = arith.maximumf %8, %9 : vector<16x256xf32>
    %11 = arith.truncf %10 : vector<16x256xf32> to vector<16x256xbf16>
    %c0_8 = arith.constant 0 : index
    %c0_9 = arith.constant 0 : index
    %12 = vector.load %arg3[%c0_8, %c0_9] : memref<256x128xbf16, #tpu.memory_space<vmem>>, vector<256x128xbf16>
    %cst_10 = arith.constant dense<0.000000e+00> : vector<16x128xf32>
    %13 = tpu.matmul %11, %12, %cst_10 {dimension_numbers = #tpu.dot_dimension_numbers<[1], [0], [0], [1], [0, 0, 1, 1], [], []>} : vector<16x256xbf16>, vector<256x128xbf16>, vector<16x128xf32> -> vector<16x128xf32>
    %14 = vector.broadcast %1 : vector<1x128xf32> to vector<16x128xf32>
    %15 = arith.addf %13, %14 : vector<16x128xf32>
    %cst_11 = arith.constant 0.000000e+00 : f32
    %16 = vector.broadcast %cst_11 : f32 to vector<16x128xf32>
    %17 = arith.maximumf %15, %16 : vector<16x128xf32>
    %18 = arith.truncf %17 : vector<16x128xf32> to vector<16x128xbf16>
    %c0_12 = arith.constant 0 : index
    %c0_13 = arith.constant 0 : index
    %19 = vector.load %arg4[%c0_12, %c0_13] : memref<128x128xbf16, #tpu.memory_space<vmem>>, vector<128x128xbf16>
    %cst_14 = arith.constant dense<0.000000e+00> : vector<16x128xf32>
    %20 = tpu.matmul %18, %19, %cst_14 {dimension_numbers = #tpu.dot_dimension_numbers<[1], [0], [0], [1], [0, 0, 1, 1], [], []>} : vector<16x128xbf16>, vector<128x128xbf16>, vector<16x128xf32> -> vector<16x128xf32>
    %21 = vector.broadcast %2 : vector<1x128xf32> to vector<16x128xf32>
    %22 = arith.addf %20, %21 : vector<16x128xf32>
    %cst_15 = arith.constant dense<0xFF800000> : vector<16xf32>
    %23 = vector.multi_reduction <maximumf>, %22, %cst_15 [1] : vector<16x128xf32> to vector<16xf32>
    %24 = vector.shape_cast %23 : vector<16xf32> to vector<16x1xf32>
    %25 = vector.broadcast %24 : vector<16x1xf32> to vector<16x128xf32>
    %26 = arith.subf %22, %25 : vector<16x128xf32>
    %27 = math.exp %26 : vector<16x128xf32>
    %cst_16 = arith.constant dense<0.000000e+00> : vector<16xf32>
    %28 = vector.multi_reduction <add>, %27, %cst_16 [1] : vector<16x128xf32> to vector<16xf32>
    %29 = vector.shape_cast %28 : vector<16xf32> to vector<16x1xf32>
    %30 = math.log %29 : vector<16x1xf32>
    %31 = vector.broadcast %30 : vector<16x1xf32> to vector<16x128xf32>
    %32 = arith.subf %26, %31 : vector<16x128xf32>
    %33 = arith.truncf %32 : vector<16x128xf32> to vector<16x128xbf16>
    %c0_17 = arith.constant 0 : index
    %c0_18 = arith.constant 0 : index
    %34 = vector.load %arg6[%c0_17, %c0_18] : memref<16x128xbf16, #tpu.memory_space<vmem>>, vector<16x128xbf16>
    tpu.vector_store %arg6[%c0_17, %c0_18], %33 {strides = array<i32>} : memref<16x128xbf16, #tpu.memory_space<vmem>>, vector<16x128xbf16>,
    return
  }
  func.func @transform_0(%arg0: i32) -> (i32, i32) {
    %c0_i32 = arith.constant 0 : i32
    %c0_i32_0 = arith.constant 0 : i32
    return %arg0, %c0_i32 : i32, i32
  }
  func.func @transform_1(%arg0: i32) -> (i32, i32) {
    %c0_i32 = arith.constant 0 : i32
    %c0_i32_0 = arith.constant 0 : i32
    %c0_i32_1 = arith.constant 0 : i32
    return %c0_i32, %c0_i32_0 : i32, i32
  }
  func.func @transform_2(%arg0: i32) -> (i32, i32) {
    %c0_i32 = arith.constant 0 : i32
    %c0_i32_0 = arith.constant 0 : i32
    %c0_i32_1 = arith.constant 0 : i32
    return %c0_i32, %c0_i32_0 : i32, i32
  }
  func.func @transform_3(%arg0: i32) -> (i32, i32) {
    %c0_i32 = arith.constant 0 : i32
    %c0_i32_0 = arith.constant 0 : i32
    %c0_i32_1 = arith.constant 0 : i32
    return %c0_i32, %c0_i32_0 : i32, i32
  }
  func.func @transform_4(%arg0: i32) -> (i32, i32) {
    %c0_i32 = arith.constant 0 : i32
    %c0_i32_0 = arith.constant 0 : i32
    %c0_i32_1 = arith.constant 0 : i32
    return %c0_i32, %c0_i32_0 : i32, i32
  }
  func.func @transform_5(%arg0: i32) -> (i32, i32) {
    %c0_i32 = arith.constant 0 : i32
    %c0_i32_0 = arith.constant 0 : i32
    return %arg0, %c0_i32 : i32, i32
  }
}

</mosaic_0001>

<llo_original>
// kernel: fwd.1
$region0: #{fwd.1}
  #allocation0 [shape = 'u32[]', space=smem, size = 0x4, offset = 0x4, fixed_abs, tag = 'smem constant byte address 0x4 - core index']
  #allocation1 [shape = 'u32[144,128]{1,0:T(1,128)}', space=vmem, size = 0x12000, scoped, tag = 'internal scratch']
  %s0 = inlined_call_operand.vmem [shape: f32[16,136], index: 0, kind: input, shape index: {}]
  %s1 = inlined_call_operand.vmem [shape: bf16[136,256], index: 1, kind: input, shape index: {}]
  %s2 = inlined_call_operand.hbm [shape: bf16[256,128], index: 2, kind: input, shape index: {}]
  %s3 = inlined_call_operand.vmem [shape: bf16[128,128], index: 3, kind: input, shape index: {}]
  %s4 = inlined_call_operand.vmem [shape: f32[1,512], index: 4, kind: input, shape index: {}]
  %s5 = inlined_call_operand.vmem [shape: bf16[16,128], index: 5, kind: output, shape index: {}]
  %s6 = sld [smem:[#allocation0]]
  $region34: #{fwd.1} parent=0
    _
  %s8 = ssub.s32 1, %s6
  %s9 = scalar_select 0, %s8, %s6
  $region1: #{fwd.1} parent=0
    #allocation2 [shape = 'u8[65536]{0}', space=vmem, size = 0x10000, scoped, tag = 'input window, operand 2, single buffered']
    #allocation3 [shape = 's32[1]{0}', space=sflag, size = 0x4, scoped, tag = 'scoped memory for fwd.1']
    %10 = vsyncpa [#allocation3], 0
    // Predicated region
    $region2: #{fwd.1} parent=1 // pred_check
      _
    $region3: #{fwd.1} parent=1 // pred_check_branch
      %12 = sbr.rel (0) target = $region5
    $region4: #{fwd.1} parent=1 // pred_region
      _
    $region5: #{fwd.1} parent=1 // pred_fallthru
      _
    // Predicated region
    $region6: #{fwd.1} parent=1 // pred_check
      _
    $region7: #{fwd.1} parent=1 // pred_check_branch
      %14 = sbr.rel (0) target = $region9
    $region8: #{fwd.1} parent=1 // pred_region
      _
    $region9: #{fwd.1} parent=1 // pred_fallthru
      _
    // Predicated region
    $region10: #{fwd.1} parent=1 // pred_check
      _
    $region11: #{fwd.1} parent=1 // pred_check_branch
      %16 = sbr.rel (0) target = $region13
    $region12: #{fwd.1} parent=1 // pred_region
      %s18 = ssub.s32 2048, 2048
      %19 = vsyncadd [#allocation3], %s18
      %s20 = sshll.u32 [#allocation2], 4
      %s21 = int_to_ptr.vmem [resolvable:$true] %s20
      %26 = dma.hbm_to_vmem [thread:$0]  %s2, 2048, %s21, [#allocation3], 64, 64, 4
    $region13: #{fwd.1} parent=1 // pred_fallthru
      _
    // Predicated region
    $region14: #{fwd.1} parent=1 // pred_check
      _
    $region15: #{fwd.1} parent=1 // pred_check_branch
      %28 = sbr.rel (0) target = $region17
    $region16: #{fwd.1} parent=1 // pred_region
      _
    $region17: #{fwd.1} parent=1 // pred_fallthru
      _
    // Predicated region
    $region18: #{fwd.1} parent=1 // pred_check
      _
    $region19: #{fwd.1} parent=1 // pred_check_branch
      %30 = sbr.rel (0) target = $region21
    $region20: #{fwd.1} parent=1 // pred_region
      _
    $region21: #{fwd.1} parent=1 // pred_fallthru
      _
    // Predicated region
    $region22: #{fwd.1} parent=1 // pred_check
      _
    $region23: #{fwd.1} parent=1 // pred_check_branch
      %32 = sbr.rel (0) target = $region25
    $region24: #{fwd.1} parent=1 // pred_region
      %33 = dma.done [#allocation3], 2048
    $region25: #{fwd.1} parent=1 // pred_fallthru
      _
    %v35 = vld [vmem:[%s4] sm:$0x3]
    %v36 = vld [vmem:[%s4 + $0x2] sm:$0x1]
    %v37 = vld [vmem:[%s4 + $0x3] sm:$0x1]
    %v38 = vld [vmem:[%s0] sm:$0xff]
    %v39 = vld [vmem:[%s0 + $0x8] sm:$0xff]
    %v40 = vld [vmem:[%s0 + $0x10] sm:$0xff]
    %v41 = vld [vmem:[%s0 + $0x18] sm:$0xff]
    %v42 = vpack.c.bf16 %v40, %v38
    %v43 = vpack.c.bf16 %v41, %v39
    %v44 = vld [vmem:[%s1] sm:$0xff]
    %v45 = vld [vmem:[%s1 + $0x8] sm:$0xff]
    %v46 = vld [vmem:[%s1 + $0x10] sm:$0xff]
    %v47 = vld [vmem:[%s1 + $0x18] sm:$0xff]
    %v48 = vld [vmem:[%s1 + $0x20] sm:$0xff]
    %v49 = vld [vmem:[%s1 + $0x28] sm:$0xff]
    %v50 = vld [vmem:[%s1 + $0x30] sm:$0xff]
    %v51 = vld [vmem:[%s1 + $0x38] sm:$0xff]
    %v52 = vld [vmem:[%s1 + $0x40] sm:$0xff]
    %v53 = vld [vmem:[%s1 + $0x48] sm:$0xff]
    %v54 = vld [vmem:[%s1 + $0x50] sm:$0xff]
    %v55 = vld [vmem:[%s1 + $0x58] sm:$0xff]
    %v56 = vld [vmem:[%s1 + $0x60] sm:$0xff]
    %v57 = vld [vmem:[%s1 + $0x68] sm:$0xff]
    %v58 = vld [vmem:[%s1 + $0x70] sm:$0xff]
    %v59 = vld [vmem:[%s1 + $0x78] sm:$0xff]
    %v60 = vld [vmem:[%s1 + $0x80] sm:$0xff]
    %v62 = vlaneseq
    %v63 = vshrl.u32 %v62, 7
    %v64 = vsub.s32 0, %v63
    %v65 = vrot.slane %v35, %v64
    %v66 = vlaneseq
    %v67 = vshrl.u32 %v66, 7
    %v68 = vsub.s32 1, %v67
    %v69 = vrot.slane %v35, %v68
    %v89 = vunpack.c.l.b16 %v44
    %v90 = vunpack.c.h.b16 %v44
    %v91 = vunpack.c.l.b16 %v45
    %v92 = vunpack.c.h.b16 %v45
    %v93 = vunpack.c.l.b16 %v46
    %v94 = vunpack.c.h.b16 %v46
    %v95 = vunpack.c.l.b16 %v47
    %v96 = vunpack.c.h.b16 %v47
    %v97 = vunpack.c.l.b16 %v48
    %v98 = vunpack.c.h.b16 %v48
    %v99 = vunpack.c.l.b16 %v49
    %v100 = vunpack.c.h.b16 %v49
    %v101 = vunpack.c.l.b16 %v50
    %v102 = vunpack.c.h.b16 %v50
    %v103 = vunpack.c.l.b16 %v51
    %v104 = vunpack.c.h.b16 %v51
    %v105 = vunpack.c.l.b16 %v52
    %v106 = vunpack.c.h.b16 %v52
    %v107 = vunpack.c.l.b16 %v53
    %v108 = vunpack.c.h.b16 %v53
    %v109 = vunpack.c.l.b16 %v54
    %v110 = vunpack.c.h.b16 %v54
    %v111 = vunpack.c.l.b16 %v55
    %v112 = vunpack.c.h.b16 %v55
    %v113 = vunpack.c.l.b16 %v56
    %v114 = vunpack.c.h.b16 %v56
    %v115 = vunpack.c.l.b16 %v57
    %v116 = vunpack.c.h.b16 %v57
    %v117 = vunpack.c.l.b16 %v58
    %v118 = vunpack.c.h.b16 %v58
    %v119 = vunpack.c.l.b16 %v59
    %v120 = vunpack.c.h.b16 %v59
    %v121 = vunpack.c.l.b16 %v60
    %v122 = vunpack.c.h.b16 %v60
    %v123 = vpack.c.b16 %v91, %v89
    %v124 = vpack.c.b16 %v92, %v90
    %v125 = vpack.c.b16 %v95, %v93
    %v126 = vpack.c.b16 %v96, %v94
    %v127 = vpack.c.b16 %v99, %v97
    %v128 = vpack.c.b16 %v100, %v98
    %v129 = vpack.c.b16 %v103, %v101
    %v130 = vpack.c.b16 %v104, %v102
    %v131 = vpack.c.b16 %v107, %v105
    %v132 = vpack.c.b16 %v108, %v106
    %v133 = vpack.c.b16 %v111, %v109
    %v134 = vpack.c.b16 %v112, %v110
    %v135 = vpack.c.b16 %v115, %v113
    %v136 = vpack.c.b16 %v116, %v114
    %v137 = vpack.c.b16 %v119, %v117
    %v138 = vpack.c.b16 %v120, %v118
    %v139 = vpack.c.b16 %v121, %v121
    %v140 = vpack.c.b16 %v122, %v122
    %vm157 = vcmask 64512
    %v159 = vsel %vm157, %v43, 0
    %vm161 = vcmask 1043456
    %v163 = vsel %vm161, %v139, 0
    %v166 = vsel %vm161, %v140, 0
    %168 = vmatprep.subr.bf16.mxu0 %v138
    %169 = vmatpush1.bf16.msra.mxu0 %v137
    %170 = vmatprep.subr.bf16.mxu0 %v136
    %171 = vmatpush1.bf16.msra.mxu0 %v135
    %172 = vmatprep.subr.bf16.mxu0 %v134
    %173 = vmatpush1.bf16.msra.mxu0 %v133
    %174 = vmatprep.subr.bf16.mxu0 %v132
    %175 = vmatpush1.bf16.msra.mxu0 %v131
    %176 = vmatprep.subr.bf16.mxu0 %v130
    %177 = vmatpush1.bf16.msra.mxu0 %v129
    %178 = vmatprep.subr.bf16.mxu0 %v128
    %179 = vmatpush1.bf16.msra.mxu0 %v127
    %180 = vmatprep.subr.bf16.mxu0 %v126
    %181 = vmatpush1.bf16.msra.mxu0 %v125
    %182 = vmatprep.subr.bf16.mxu0 %v124
    %183 = vmatpush1.bf16.msra.mxu0 %v123
    %184 = vmatprep.subr.bf16.mxu0 0
    %185 = vmatpush2.bf16.msra.mxu0 0
    %186 = vmatprep.subr.bf16.mxu0 0
    %187 = vmatpush2.bf16.msra.mxu0 0
    %188 = vmatprep.subr.bf16.mxu0 0
    %189 = vmatpush2.bf16.msra.mxu0 0
    %190 = vmatprep.subr.bf16.mxu0 0
    %191 = vmatpush2.bf16.msra.mxu0 0
    %192 = vmatprep.subr.bf16.mxu0 0
    %193 = vmatpush2.bf16.msra.mxu0 0
    %194 = vmatprep.subr.bf16.mxu0 0
    %195 = vmatpush2.bf16.msra.mxu0 0
    %196 = vmatprep.subr.bf16.mxu0 0
    %197 = vmatpush2.bf16.msra.mxu0 0
    %198 = vmatprep.subr.bf16.mxu0 %v166
    %199 = vmatpush2.bf16.msra.mxu0 %v163
    %200 = vmatprep.mubr.bf16.mxu0 %v159
    %201 = vmatmul.mubr.bf16.gmra.mxu0 %v42
    %v202 = vpop.f32.mrf.mxu0
    %v203 = vadd.f32 %v65, %v202
    %v204 = vpop.f32.mrf.mxu0
    %v205 = vadd.f32 %v69, %v204
    %v206 = vpop.f32.mrf.mxu0
    %v207 = vadd.f32 %v65, %v206
    %v208 = vpop.f32.mrf.mxu0
    %v209 = vadd.f32 %v69, %v208
    %210 = vdwg.mxu0
    %v211 = vmax.f32 %v203, 0.0
    %v212 = vmax.f32 %v205, 0.0
    %v213 = vmax.f32 %v207, 0.0
    %v214 = vmax.f32 %v209, 0.0
    %v215 = vpack.c.bf16 %v213, %v211
    %v216 = vpack.c.bf16 %v214, %v212
    %v217 = vld [vmem:[#allocation2] sm:$0xf]
    %v218 = vld [vmem:[#allocation2 + $0x4] sm:$0xf]
    %v219 = vld [vmem:[#allocation2 + $0x8] sm:$0xf]
    %v220 = vld [vmem:[#allocation2 + $0xc] sm:$0xf]
    %v221 = vld [vmem:[#allocation2 + $0x10] sm:$0xf]
    %v222 = vld [vmem:[#allocation2 + $0x14] sm:$0xf]
    %v223 = vld [vmem:[#allocation2 + $0x18] sm:$0xf]
    %v224 = vld [vmem:[#allocation2 + $0x1c] sm:$0xf]
    %v225 = vld [vmem:[#allocation2 + $0x20] sm:$0xf]
    %v226 = vld [vmem:[#allocation2 + $0x24] sm:$0xf]
    %v227 = vld [vmem:[#allocation2 + $0x28] sm:$0xf]
    %v228 = vld [vmem:[#allocation2 + $0x2c] sm:$0xf]
    %v229 = vld [vmem:[#allocation2 + $0x30] sm:$0xf]
    %v230 = vld [vmem:[#allocation2 + $0x34] sm:$0xf]
    %v231 = vld [vmem:[#allocation2 + $0x38] sm:$0xf]
    %v232 = vld [vmem:[#allocation2 + $0x3c] sm:$0xf]
    %v233 = vld [vmem:[#allocation2 + $0x40] sm:$0xf]
    %v234 = vld [vmem:[#allocation2 + $0x44] sm:$0xf]
    %v235 = vld [vmem:[#allocation2 + $0x48] sm:$0xf]
    %v236 = vld [vmem:[#allocation2 + $0x4c] sm:$0xf]
    %v237 = vld [vmem:[#allocation2 + $0x50] sm:$0xf]
    %v238 = vld [vmem:[#allocation2 + $0x54] sm:$0xf]
    %v239 = vld [vmem:[#allocation2 + $0x58] sm:$0xf]
    %v240 = vld [vmem:[#allocation2 + $0x5c] sm:$0xf]
    %v241 = vld [vmem:[#allocation2 + $0x60] sm:$0xf]
    %v242 = vld [vmem:[#allocation2 + $0x64] sm:$0xf]
    %v243 = vld [vmem:[#allocation2 + $0x68] sm:$0xf]
    %v244 = vld [vmem:[#allocation2 + $0x6c] sm:$0xf]
    %v245 = vld [vmem:[#allocation2 + $0x70] sm:$0xf]
    %v246 = vld [vmem:[#allocation2 + $0x74] sm:$0xf]
    %v247 = vld [vmem:[#allocation2 + $0x78] sm:$0xf]
    %v248 = vld [vmem:[#allocation2 + $0x7c] sm:$0xf]
    %v250 = vlaneseq
    %v251 = vshrl.u32 %v250, 7
    %v252 = vsub.s32 0, %v251
    %v253 = vrot.slane %v36, %v252
    %v287 = vunpack.c.l.b16 %v217
    %v288 = vunpack.c.l.b16 %v218
    %v289 = vunpack.c.l.b16 %v219
    %v290 = vunpack.c.l.b16 %v220
    %v291 = vunpack.c.l.b16 %v221
    %v292 = vunpack.c.l.b16 %v222
    %v293 = vunpack.c.l.b16 %v223
    %v294 = vunpack.c.l.b16 %v224
    %v295 = vunpack.c.l.b16 %v225
    %v296 = vunpack.c.l.b16 %v226
    %v297 = vunpack.c.l.b16 %v227
    %v298 = vunpack.c.l.b16 %v228
    %v299 = vunpack.c.l.b16 %v229
    %v300 = vunpack.c.l.b16 %v230
    %v301 = vunpack.c.l.b16 %v231
    %v302 = vunpack.c.l.b16 %v232
    %v303 = vunpack.c.l.b16 %v233
    %v304 = vunpack.c.l.b16 %v234
    %v305 = vunpack.c.l.b16 %v235
    %v306 = vunpack.c.l.b16 %v236
    %v307 = vunpack.c.l.b16 %v237
    %v308 = vunpack.c.l.b16 %v238
    %v309 = vunpack.c.l.b16 %v239
    %v310 = vunpack.c.l.b16 %v240
    %v311 = vunpack.c.l.b16 %v241
    %v312 = vunpack.c.l.b16 %v242
    %v313 = vunpack.c.l.b16 %v243
    %v314 = vunpack.c.l.b16 %v244
    %v315 = vunpack.c.l.b16 %v245
    %v316 = vunpack.c.l.b16 %v246
    %v317 = vunpack.c.l.b16 %v247
    %v318 = vunpack.c.l.b16 %v248
    %v319 = vpack.c.b16 %v288, %v287
    %v320 = vpack.c.b16 %v290, %v289
    %v321 = vpack.c.b16 %v292, %v291
    %v322 = vpack.c.b16 %v294, %v293
    %v323 = vpack.c.b16 %v296, %v295
    %v324 = vpack.c.b16 %v298, %v297
    %v325 = vpack.c.b16 %v300, %v299
    %v326 = vpack.c.b16 %v302, %v301
    %v327 = vpack.c.b16 %v304, %v303
    %v328 = vpack.c.b16 %v306, %v305
    %v329 = vpack.c.b16 %v308, %v307
    %v330 = vpack.c.b16 %v310, %v309
    %v331 = vpack.c.b16 %v312, %v311
    %v332 = vpack.c.b16 %v314, %v313
    %v333 = vpack.c.b16 %v316, %v315
    %v334 = vpack.c.b16 %v318, %v317
    %351 = vmatprep.subr.bf16.mxu0 0
    %352 = vmatpush1.bf16.msra.mxu0 %v326
    %353 = vmatprep.subr.bf16.mxu0 0
    %354 = vmatpush1.bf16.msra.mxu0 %v325
    %355 = vmatprep.subr.bf16.mxu0 0
    %356 = vmatpush1.bf16.msra.mxu0 %v324
    %357 = vmatprep.subr.bf16.mxu0 0
    %358 = vmatpush1.bf16.msra.mxu0 %v323
    %359 = vmatprep.subr.bf16.mxu0 0
    %360 = vmatpush1.bf16.msra.mxu0 %v322
    %361 = vmatprep.subr.bf16.mxu0 0
    %362 = vmatpush1.bf16.msra.mxu0 %v321
    %363 = vmatprep.subr.bf16.mxu0 0
    %364 = vmatpush1.bf16.msra.mxu0 %v320
    %365 = vmatprep.subr.bf16.mxu0 0
    %366 = vmatpush1.bf16.msra.mxu0 %v319
    %367 = vmatprep.subr.bf16.mxu0 0
    %368 = vmatpush2.bf16.msra.mxu0 %v334
    %369 = vmatprep.subr.bf16.mxu0 0
    %370 = vmatpush2.bf16.msra.mxu0 %v333
    %371 = vmatprep.subr.bf16.mxu0 0
    %372 = vmatpush2.bf16.msra.mxu0 %v332
    %373 = vmatprep.subr.bf16.mxu0 0
    %374 = vmatpush2.bf16.msra.mxu0 %v331
    %375 = vmatprep.subr.bf16.mxu0 0
    %376 = vmatpush2.bf16.msra.mxu0 %v330
    %377 = vmatprep.subr.bf16.mxu0 0
    %378 = vmatpush2.bf16.msra.mxu0 %v329
    %379 = vmatprep.subr.bf16.mxu0 0
    %380 = vmatpush2.bf16.msra.mxu0 %v328
    %381 = vmatprep.subr.bf16.mxu0 0
    %382 = vmatpush2.bf16.msra.mxu0 %v327
    %383 = vmatprep.mubr.bf16.mxu0 %v216
    %384 = vmatmul.mubr.bf16.gmra.mxu0 %v215
    %v385 = vpop.f32.mrf.mxu0
    %v386 = vadd.f32 %v253, %v385
    %v387 = vpop.f32.mrf.mxu0
    %v388 = vpop.f32.mrf.mxu0
    %v389 = vadd.f32 %v253, %v388
    %v390 = vpop.f32.mrf.mxu0
    %391 = vdwg.mxu0
    %v392 = vmax.f32 %v386, 0.0
    %v393 = vmax.f32 %v389, 0.0
    %v394 = vpack.c.bf16 %v393, %v392
    %v395 = vld [vmem:[%s3] sm:$0xf]
    %v396 = vld [vmem:[%s3 + $0x4] sm:$0xf]
    %v397 = vld [vmem:[%s3 + $0x8] sm:$0xf]
    %v398 = vld [vmem:[%s3 + $0xc] sm:$0xf]
    %v399 = vld [vmem:[%s3 + $0x10] sm:$0xf]
    %v400 = vld [vmem:[%s3 + $0x14] sm:$0xf]
    %v401 = vld [vmem:[%s3 + $0x18] sm:$0xf]
    %v402 = vld [vmem:[%s3 + $0x1c] sm:$0xf]
    %v403 = vld [vmem:[%s3 + $0x20] sm:$0xf]
    %v404 = vld [vmem:[%s3 + $0x24] sm:$0xf]
    %v405 = vld [vmem:[%s3 + $0x28] sm:$0xf]
    %v406 = vld [vmem:[%s3 + $0x2c] sm:$0xf]
    %v407 = vld [vmem:[%s3 + $0x30] sm:$0xf]
    %v408 = vld [vmem:[%s3 + $0x34] sm:$0xf]
    %v409 = vld [vmem:[%s3 + $0x38] sm:$0xf]
    %v410 = vld [vmem:[%s3 + $0x3c] sm:$0xf]
    %v412 = vlaneseq
    %v413 = vshrl.u32 %v412, 7
    %v414 = vsub.s32 0, %v413
    %v415 = vrot.slane %v37, %v414
    %v433 = vunpack.c.l.b16 %v395
    %v434 = vunpack.c.l.b16 %v396
    %v435 = vunpack.c.l.b16 %v397
    %v436 = vunpack.c.l.b16 %v398
    %v437 = vunpack.c.l.b16 %v399
    %v438 = vunpack.c.l.b16 %v400
    %v439 = vunpack.c.l.b16 %v401
    %v440 = vunpack.c.l.b16 %v402
    %v441 = vunpack.c.l.b16 %v403
    %v442 = vunpack.c.l.b16 %v404
    %v443 = vunpack.c.l.b16 %v405
    %v444 = vunpack.c.l.b16 %v406
    %v445 = vunpack.c.l.b16 %v407
    %v446 = vunpack.c.l.b16 %v408
    %v447 = vunpack.c.l.b16 %v409
    %v448 = vunpack.c.l.b16 %v410
    %v449 = vpack.c.b16 %v434, %v433
    %v450 = vpack.c.b16 %v436, %v435
    %v451 = vpack.c.b16 %v438, %v437
    %v452 = vpack.c.b16 %v440, %v439
    %v453 = vpack.c.b16 %v442, %v441
    %v454 = vpack.c.b16 %v444, %v443
    %v455 = vpack.c.b16 %v446, %v445
    %v456 = vpack.c.b16 %v448, %v447
    %465 = vmatprep.subr.bf16.mxu0 0
    %466 = vmatpush1.bf16.msra.mxu0 %v456
    %467 = vmatprep.subr.bf16.mxu0 0
    %468 = vmatpush1.bf16.msra.mxu0 %v455
    %469 = vmatprep.subr.bf16.mxu0 0
    %470 = vmatpush1.bf16.msra.mxu0 %v454
    %471 = vmatprep.subr.bf16.mxu0 0
    %472 = vmatpush1.bf16.msra.mxu0 %v453
    %473 = vmatprep.subr.bf16.mxu0 0
    %474 = vmatpush1.bf16.msra.mxu0 %v452
    %475 = vmatprep.subr.bf16.mxu0 0
    %476 = vmatpush1.bf16.msra.mxu0 %v451
    %477 = vmatprep.subr.bf16.mxu0 0
    %478 = vmatpush1.bf16.msra.mxu0 %v450
    %479 = vmatprep.subr.bf16.mxu0 0
    %480 = vmatpush1.bf16.msra.mxu0 %v449
    %481 = vmatprep.subr.bf16.mxu0 0
    %482 = vmatpush2.bf16.msra.mxu0 0
    %483 = vmatprep.subr.bf16.mxu0 0
    %484 = vmatpush2.bf16.msra.mxu0 0
    %485 = vmatprep.subr.bf16.mxu0 0
    %486 = vmatpush2.bf16.msra.mxu0 0
    %487 = vmatprep.subr.bf16.mxu0 0
    %488 = vmatpush2.bf16.msra.mxu0 0
    %489 = vmatprep.subr.bf16.mxu0 0
    %490 = vmatpush2.bf16.msra.mxu0 0
    %491 = vmatprep.subr.bf16.mxu0 0
    %492 = vmatpush2.bf16.msra.mxu0 0
    %493 = vmatprep.subr.bf16.mxu0 0
    %494 = vmatpush2.bf16.msra.mxu0 0
    %495 = vmatprep.subr.bf16.mxu0 0
    %496 = vmatpush2.bf16.msra.mxu0 0
    %497 = vmatprep.mubr.bf16.mxu0 0
    %498 = vmatmul.mubr.bf16.gmra.mxu0 %v394
    %v499 = vpop.f32.mrf.mxu0
    %v500 = vadd.f32 %v415, %v499
    %v501 = vpop.f32.mrf.mxu0
    %v502 = vpop.f32.mrf.mxu0
    %v503 = vadd.f32 %v415, %v502
    %v504 = vpop.f32.mrf.mxu0
    %505 = vdwg.mxu0
    %506 = vmax.xlane.f32.xlu0 %v500
    %v507 = vpop.xlane.xlu0 %506
    %508 = vmax.xlane.f32.xlu0 %v503
    %v509 = vpop.xlane.xlu0 %508
    %v510 = vsub.f32 %v500, %v507
    %v511 = vsub.f32 %v503, %v509
    %v512 = vmul.f32 %v510, 1.442695
    %v513 = vpow.pop %v512
    %v514 = vmul.f32 %v511, 1.442695
    %v515 = vpow.pop %v514
    %516 = vadd.xlane.f32.xlu0 %v513
    %v517 = vpop.xlane.xlu0 %516
    %518 = vadd.xlane.f32.xlu0 %v515
    %v519 = vpop.xlane.xlu0 %518
    %v520 = vlog2.pop %v517
    %v521 = vmul.f32 %v520, 0.6931472
    %v522 = vlog2.pop %v519
    %v523 = vmul.f32 %v522, 0.6931472
    %v524 = vsub.f32 %v510, %v521
    %v525 = vsub.f32 %v511, %v523
    %v526 = vpack.c.bf16 %v525, %v524
    %v528 = vunpack.c.l.b16 %v526
    %v529 = vunpack.c.h.b16 %v526
    %v530 = vpack.c.b16 %v528, %v528
    %v531 = vpack.c.b16 %v529, %v529
    %534 = vst [vmem:[%s5] sm:$0xf] %v530
    %535 = vst [vmem:[%s5 + $0x4] sm:$0xf] %v531
    // Predicated region
    $region26: #{fwd.1} parent=1 // pred_check
      _
    $region27: #{fwd.1} parent=1 // pred_check_branch
      %537 = sbr.rel (0) target = $region29
    $region28: #{fwd.1} parent=1 // pred_region
      _
    $region29: #{fwd.1} parent=1 // pred_fallthru
      _
    // Predicated region
    $region30: #{fwd.1} parent=1 // pred_check
      _
    $region31: #{fwd.1} parent=1 // pred_check_branch
      %539 = sbr.rel (0) target = $region33
    $region32: #{fwd.1} parent=1 // pred_region
      _
    $region33: #{fwd.1} parent=1 // pred_fallthru
      _
    %540 = vsyncpa [#allocation3], 1

</llo_original>
